<compile_context>
chip_gen: v7x
topology: tpu7x:2x2x1
jax: 0.10.0
libtpu: 0.0.40
codegen_flags: <defaults>
</compile_context>

<pallas_src>
import jax
import jax.numpy as jnp
from jax.experimental import pallas as pl
from jax.experimental.pallas import tpu as pltpu

# Hyperparameters implied by the module's __init__ (kept small for the example).
EMBEDDING_SIZE = 32
FF_DIMENSION = 64
LN_EPS = 1e-5      # nn.LayerNorm default
LANES = 128


def _round_up(n, m):
    return ((n + m - 1) // m) * m


def ffn_pos_kernel(x_ref, w1_ref, b1_ref, w2_ref, b2_ref, gamma_ref, beta_ref,
                   smean_ref, o_ref):
    # x_ref: (tm, 128) packed tile; each row holds 128//E consecutive tokens (lane-dense).
    x = x_ref[...]
    x_f32 = x.astype(jnp.float32)       # residual / LN path in f32
    x_bf = x.astype(jnp.bfloat16)       # MXU operand

    # conv1 (1x1): block-diagonal W1 -> (tm, T*FF), f32 accumulate on the MXU.
    h = jnp.dot(x_bf, w1_ref[...], preferred_element_type=jnp.float32) + b1_ref[...]

    # conv2 (1x1): block-diagonal W2 -> (tm, 128), back in the packed embedding layout.
    y = jnp.dot(h.astype(jnp.bfloat16), w2_ref[...],
                preferred_element_type=jnp.float32)
    y = y + b2_ref[...] + x_f32         # bias + residual connection (f32)

    # LayerNorm over each token's 32-lane group.  Per-group mean and E[(y-mean)^2] are
    # computed as matmuls with a block-diagonal (1/E) matrix: lane-dense, MXU, f32 acc.
    smean = smean_ref[...]
    mean = jnp.dot(y.astype(jnp.bfloat16), smean, preferred_element_type=jnp.float32)
    diff = y - mean
    d2 = jnp.square(diff).astype(jnp.bfloat16)
    var = jnp.dot(d2, smean, preferred_element_type=jnp.float32)
    y_norm = diff * jax.lax.rsqrt(var + LN_EPS)
    o_ref[...] = (y_norm * gamma_ref[...] + beta_ref[...]).astype(o_ref.dtype)


def feed_forward_position(x, w1, b1, w2, b2, gamma, beta, *, tm=2048):
    """x: (B, S, E).  w1: (E, FF), b1: (FF,), w2: (FF, E), b2/gamma/beta: (E,).
    Returns (B, S, E) in x.dtype."""
    B, S, E = x.shape
    FF = w1.shape[1]
    M = B * S

    if LANES % E != 0:
        # TODO(synk): for E not dividing 128, fall back to an un-packed (tm, E) layout.
        raise NotImplementedError("packed layout requires embedding size dividing 128")
    T = LANES // E                       # tokens packed per lane-row (4 for E=32)

    # Free, order-preserving reshape to a lane-dense (R, 128) slab; pad rows as needed.
    R = pl.cdiv(M, T)
    tm = _round_up(min(int(tm), _round_up(R, 8)), 8)
    R_pad = _round_up(R, tm)
    M_pad = R_pad * T

    x_flat = x.reshape(M * E)
    if M_pad != M:
        x_flat = jnp.pad(x_flat, (0, (M_pad - M) * E))   # padded tokens are harmless
    x_packed = x_flat.reshape(R_pad, LANES)

    # Block-diagonal packed weights (tiny; resident in VMEM across the whole grid).
    eye_t = jnp.eye(T, dtype=jnp.float32)
    w1_blk = jnp.kron(eye_t, w1.astype(jnp.float32)).astype(jnp.bfloat16)   # (128, T*FF)
    w2_blk = jnp.kron(eye_t, w2.astype(jnp.float32)).astype(jnp.bfloat16)   # (T*FF, 128)
    smean = jnp.kron(eye_t, jnp.full((E, E), 1.0 / E, jnp.float32)).astype(jnp.bfloat16)
    b1_p = jnp.tile(b1.astype(jnp.float32), T).reshape(1, T * FF)
    b2_p = jnp.tile(b2.astype(jnp.float32), T).reshape(1, LANES)
    gamma_p = jnp.tile(gamma.astype(jnp.float32), T).reshape(1, LANES)
    beta_p = jnp.tile(beta.astype(jnp.float32), T).reshape(1, LANES)

    grid = (R_pad // tm,)

    itemsize = jnp.dtype(x.dtype).itemsize
    flops_per_row = (2 * LANES * (T * FF)          # conv1
                     + 2 * (T * FF) * LANES        # conv2
                     + 2 * 2 * LANES * LANES       # LN segment-mean matmuls
                     + 12 * LANES)                 # elementwise
    w_bytes = (LANES * T * FF + T * FF * LANES + LANES * LANES) * 2 \
              + 4 * (T * FF + 3 * LANES)
    cost = pl.CostEstimate(
        flops=R_pad * flops_per_row,
        transcendentals=R_pad * LANES,                                # rsqrt
        bytes_accessed=2 * R_pad * LANES * itemsize + w_bytes,
    )

    out_packed = pl.pallas_call(
        ffn_pos_kernel,
        out_shape=jax.ShapeDtypeStruct((R_pad, LANES), x.dtype),
        grid_spec=pltpu.PrefetchScalarGridSpec(
            num_scalar_prefetch=0,
            grid=grid,
            in_specs=[
                pl.BlockSpec((tm, LANES), lambda i: (i, 0)),      # packed x tile
                pl.BlockSpec((LANES, T * FF), lambda i: (0, 0)),  # W1 block-diag (resident)
                pl.BlockSpec((1, T * FF), lambda i: (0, 0)),      # b1 packed
                pl.BlockSpec((T * FF, LANES), lambda i: (0, 0)),  # W2 block-diag (resident)
                pl.BlockSpec((1, LANES), lambda i: (0, 0)),       # b2 packed
                pl.BlockSpec((1, LANES), lambda i: (0, 0)),       # LN gamma packed
                pl.BlockSpec((1, LANES), lambda i: (0, 0)),       # LN beta packed
                pl.BlockSpec((LANES, LANES), lambda i: (0, 0)),   # segment-mean matrix
            ],
            out_specs=pl.BlockSpec((tm, LANES), lambda i: (i, 0)),
        ),
        compiler_params=pltpu.CompilerParams(dimension_semantics=("parallel",)),
        cost_estimate=cost,
    )(x_packed, w1_blk, b1_p, w2_blk, b2_p, gamma_p, beta_p, smean)

    return out_packed.reshape(M_pad * E)[: M * E].reshape(B, S, E)


# ---------------------------------------------------------------------------
# References for the self-test.

def reference_f32(x, w1, b1, w2, b2, gamma, beta):
    h = jnp.einsum("bse,ef->bsf", x, w1) + b1
    y = jnp.einsum("bsf,fe->bse", h, w2) + b2 + x
    mean = jnp.mean(y, axis=-1, keepdims=True)
    var = jnp.mean((y - mean) ** 2, axis=-1, keepdims=True)
    return (y - mean) * jax.lax.rsqrt(var + LN_EPS) * gamma + beta


def reference_matched(x, w1, b1, w2, b2, gamma, beta):
    # Mirrors the kernel's precision choices: bf16 MXU operands, f32 accumulation, bf16
    # operands for the LN segment reductions (1/E is exact in bf16), f32 LN arithmetic.
    h = jnp.einsum("bse,ef->bsf", x.astype(jnp.bfloat16), w1.astype(jnp.bfloat16),
                   preferred_element_type=jnp.float32) + b1
    y = jnp.einsum("bsf,fe->bse", h.astype(jnp.bfloat16), w2.astype(jnp.bfloat16),
                   preferred_element_type=jnp.float32) + b2 + x
    y_b = y.astype(jnp.bfloat16).astype(jnp.float32)
    mean = jnp.mean(y_b, axis=-1, keepdims=True)
    diff = y - mean
    d2 = jnp.square(diff).astype(jnp.bfloat16).astype(jnp.float32)
    var = jnp.mean(d2, axis=-1, keepdims=True)
    return diff * jax.lax.rsqrt(var + LN_EPS) * gamma + beta


if __name__ == "__main__":
    key = jax.random.PRNGKey(0)
    k_x, k_w1, k_b1, k_w2, k_b2, k_g, k_be = jax.random.split(key, 7)

    B, S, E, FF = 2, 8, EMBEDDING_SIZE, FF_DIMENSION

    x = jax.random.normal(k_x, (B, S, E), dtype=jnp.float32)

    # Deterministic synthetic parameters (shapes mirror the PyTorch module):
    #   conv1.weight: (FF, E, 1) -> stored here already squeezed + transposed as (E, FF)
    #   conv2.weight: (E, FF, 1) -> stored as (FF, E)
    w1 = jax.random.normal(k_w1, (E, FF), dtype=jnp.float32) * (1.0 / jnp.sqrt(E))
    b1 = jax.random.normal(k_b1, (FF,), dtype=jnp.float32) * 0.01
    w2 = jax.random.normal(k_w2, (FF, E), dtype=jnp.float32) * (1.0 / jnp.sqrt(FF))
    b2 = jax.random.normal(k_b2, (E,), dtype=jnp.float32) * 0.01
    gamma = 1.0 + 0.1 * jax.random.normal(k_g, (E,), dtype=jnp.float32)
    beta = 0.05 * jax.random.normal(k_be, (E,), dtype=jnp.float32)

    ffn = jax.jit(feed_forward_position)
    out = ffn(x, w1, b1, w2, b2, gamma, beta)
    out = jax.block_until_ready(out)

    assert out.shape == (B, S, E)
    assert bool(jnp.all(jnp.isfinite(out)))

    # Tight check against a reference with matching mixed precision.
    ref_mx = reference_matched(x, w1, b1, w2, b2, gamma, beta)
    assert jnp.allclose(out, ref_mx, atol=2e-3, rtol=2e-3), "mismatch vs matched-precision reference"

    # Loose sanity check against the pure-f32 reference (bf16 MXU operands in the kernel).
    ref = reference_f32(x, w1, b1, w2, b2, gamma, beta)
    assert jnp.allclose(out, ref, atol=6e-2, rtol=5e-2), "mismatch vs f32 reference"

    print("KERNEL_OK")
</pallas_src>

<mosaic_0001>
module attributes {stable_mosaic.version = 11 : i64} {
  func.func @ffn_pos_kernel(%arg0: i32, %arg1: memref<8x128xf32, #tpu.memory_space<vmem>>, %arg2: memref<128x256xbf16, #tpu.memory_space<vmem>>, %arg3: memref<1x256xf32, #tpu.memory_space<vmem>>, %arg4: memref<256x128xbf16, #tpu.memory_space<vmem>>, %arg5: memref<1x128xf32, #tpu.memory_space<vmem>>, %arg6: memref<1x128xf32, #tpu.memory_space<vmem>>, %arg7: memref<1x128xf32, #tpu.memory_space<vmem>>, %arg8: memref<128x128xbf16, #tpu.memory_space<vmem>>, %arg9: memref<8x128xf32, #tpu.memory_space<vmem>>) attributes {dimension_semantics = [#tpu.dimension_semantics<parallel>], iteration_bounds = array<i64: 1>, scalar_prefetch = 0 : i64, scratch_operands = 0 : i64, tpu.core_type = #tpu.core_type<tc>, window_params = [{transform_indices = @transform_0, window_bounds = array<i64: 8, 128>}, {pipeline_mode = #tpu.pipeline_mode<synchronous>, transform_indices = @transform_1, window_bounds = array<i64: 128, 256>}, {pipeline_mode = #tpu.pipeline_mode<synchronous>, transform_indices = @transform_2, window_bounds = array<i64: 1, 256>}, {pipeline_mode = #tpu.pipeline_mode<synchronous>, transform_indices = @transform_3, window_bounds = array<i64: 256, 128>}, {pipeline_mode = #tpu.pipeline_mode<synchronous>, transform_indices = @transform_4, window_bounds = array<i64: 1, 128>}, {pipeline_mode = #tpu.pipeline_mode<synchronous>, transform_indices = @transform_5, window_bounds = array<i64: 1, 128>}, {pipeline_mode = #tpu.pipeline_mode<synchronous>, transform_indices = @transform_6, window_bounds = array<i64: 1, 128>}, {pipeline_mode = #tpu.pipeline_mode<synchronous>, transform_indices = @transform_7, window_bounds = array<i64: 128, 128>}, {transform_indices = @transform_8, window_bounds = array<i64: 8, 128>}]} {
    %c0 = arith.constant 0 : index
    %c0_0 = arith.constant 0 : index
    %0 = vector.load %arg1[%c0, %c0_0] : memref<8x128xf32, #tpu.memory_space<vmem>>, vector<8x128xf32>
    %1 = arith.truncf %0 : vector<8x128xf32> to vector<8x128xbf16>
    %c0_1 = arith.constant 0 : index
    %c0_2 = arith.constant 0 : index
    %2 = vector.load %arg2[%c0_1, %c0_2] : memref<128x256xbf16, #tpu.memory_space<vmem>>, vector<128x256xbf16>
    %cst = arith.constant dense<0.000000e+00> : vector<8x256xf32>
    %3 = tpu.matmul %1, %2, %cst {dimension_numbers = #tpu.dot_dimension_numbers<[1], [0], [0], [1], [0, 0, 1, 1], [], []>} : vector<8x128xbf16>, vector<128x256xbf16>, vector<8x256xf32> -> vector<8x256xf32>
    %c0_3 = arith.constant 0 : index
    %c0_4 = arith.constant 0 : index
    %4 = vector.load %arg3[%c0_3, %c0_4] : memref<1x256xf32, #tpu.memory_space<vmem>>, vector<1x256xf32>
    %5 = vector.broadcast %4 : vector<1x256xf32> to vector<8x256xf32>
    %6 = arith.addf %3, %5 : vector<8x256xf32>
    %7 = arith.truncf %6 : vector<8x256xf32> to vector<8x256xbf16>
    %c0_5 = arith.constant 0 : index
    %c0_6 = arith.constant 0 : index
    %8 = vector.load %arg4[%c0_5, %c0_6] : memref<256x128xbf16, #tpu.memory_space<vmem>>, vector<256x128xbf16>
    %cst_7 = arith.constant dense<0.000000e+00> : vector<8x128xf32>
    %9 = tpu.matmul %7, %8, %cst_7 {dimension_numbers = #tpu.dot_dimension_numbers<[1], [0], [0], [1], [0, 0, 1, 1], [], []>} : vector<8x256xbf16>, vector<256x128xbf16>, vector<8x128xf32> -> vector<8x128xf32>
    %c0_8 = arith.constant 0 : index
    %c0_9 = arith.constant 0 : index
    %10 = vector.load %arg5[%c0_8, %c0_9] : memref<1x128xf32, #tpu.memory_space<vmem>>, vector<1x128xf32>
    %11 = vector.broadcast %10 : vector<1x128xf32> to vector<8x128xf32>
    %12 = arith.addf %9, %11 : vector<8x128xf32>
    %13 = arith.addf %12, %0 : vector<8x128xf32>
    %c0_10 = arith.constant 0 : index
    %c0_11 = arith.constant 0 : index
    %14 = vector.load %arg8[%c0_10, %c0_11] : memref<128x128xbf16, #tpu.memory_space<vmem>>, vector<128x128xbf16>
    %15 = arith.truncf %13 : vector<8x128xf32> to vector<8x128xbf16>
    %cst_12 = arith.constant dense<0.000000e+00> : vector<8x128xf32>
    %16 = tpu.matmul %15, %14, %cst_12 {dimension_numbers = #tpu.dot_dimension_numbers<[1], [0], [0], [1], [0, 0, 1, 1], [], []>} : vector<8x128xbf16>, vector<128x128xbf16>, vector<8x128xf32> -> vector<8x128xf32>
    %17 = arith.subf %13, %16 : vector<8x128xf32>
    %18 = arith.mulf %17, %17 : vector<8x128xf32>
    %19 = arith.truncf %18 : vector<8x128xf32> to vector<8x128xbf16>
    %cst_13 = arith.constant dense<0.000000e+00> : vector<8x128xf32>
    %20 = tpu.matmul %19, %14, %cst_13 {dimension_numbers = #tpu.dot_dimension_numbers<[1], [0], [0], [1], [0, 0, 1, 1], [], []>} : vector<8x128xbf16>, vector<128x128xbf16>, vector<8x128xf32> -> vector<8x128xf32>
    %cst_14 = arith.constant 9.99999974E-6 : f32
    %21 = vector.broadcast %cst_14 : f32 to vector<8x128xf32>
    %22 = arith.addf %20, %21 : vector<8x128xf32>
    %23 = math.rsqrt %22 : vector<8x128xf32>
    %24 = arith.mulf %17, %23 : vector<8x128xf32>
    %c0_15 = arith.constant 0 : index
    %c0_16 = arith.constant 0 : index
    %25 = vector.load %arg6[%c0_15, %c0_16] : memref<1x128xf32, #tpu.memory_space<vmem>>, vector<1x128xf32>
    %26 = vector.broadcast %25 : vector<1x128xf32> to vector<8x128xf32>
    %27 = arith.mulf %24, %26 : vector<8x128xf32>
    %c0_17 = arith.constant 0 : index
    %c0_18 = arith.constant 0 : index
    %28 = vector.load %arg7[%c0_17, %c0_18] : memref<1x128xf32, #tpu.memory_space<vmem>>, vector<1x128xf32>
    %29 = vector.broadcast %28 : vector<1x128xf32> to vector<8x128xf32>
    %30 = arith.addf %27, %29 : vector<8x128xf32>
    %c0_19 = arith.constant 0 : index
    %c0_20 = arith.constant 0 : index
    %31 = vector.load %arg9[%c0_19, %c0_20] : memref<8x128xf32, #tpu.memory_space<vmem>>, vector<8x128xf32>
    tpu.vector_store %arg9[%c0_19, %c0_20], %30 {strides = array<i32>} : memref<8x128xf32, #tpu.memory_space<vmem>>, vector<8x128xf32>,
    return
  }
  func.func @transform_0(%arg0: i32) -> (i32, i32) {
    %c0_i32 = arith.constant 0 : i32
    %c0_i32_0 = arith.constant 0 : i32
    return %arg0, %c0_i32 : i32, i32
  }
  func.func @transform_1(%arg0: i32) -> (i32, i32) {
    %c0_i32 = arith.constant 0 : i32
    %c0_i32_0 = arith.constant 0 : i32
    %c0_i32_1 = arith.constant 0 : i32
    return %c0_i32, %c0_i32_0 : i32, i32
  }
  func.func @transform_2(%arg0: i32) -> (i32, i32) {
    %c0_i32 = arith.constant 0 : i32
    %c0_i32_0 = arith.constant 0 : i32
    %c0_i32_1 = arith.constant 0 : i32
    return %c0_i32, %c0_i32_0 : i32, i32
  }
  func.func @transform_3(%arg0: i32) -> (i32, i32) {
    %c0_i32 = arith.constant 0 : i32
    %c0_i32_0 = arith.constant 0 : i32
    %c0_i32_1 = arith.constant 0 : i32
    return %c0_i32, %c0_i32_0 : i32, i32
  }
  func.func @transform_4(%arg0: i32) -> (i32, i32) {
    %c0_i32 = arith.constant 0 : i32
    %c0_i32_0 = arith.constant 0 : i32
    %c0_i32_1 = arith.constant 0 : i32
    return %c0_i32, %c0_i32_0 : i32, i32
  }
  func.func @transform_5(%arg0: i32) -> (i32, i32) {
    %c0_i32 = arith.constant 0 : i32
    %c0_i32_0 = arith.constant 0 : i32
    %c0_i32_1 = arith.constant 0 : i32
    return %c0_i32, %c0_i32_0 : i32, i32
  }
  func.func @transform_6(%arg0: i32) -> (i32, i32) {
    %c0_i32 = arith.constant 0 : i32
    %c0_i32_0 = arith.constant 0 : i32
    %c0_i32_1 = arith.constant 0 : i32
    return %c0_i32, %c0_i32_0 : i32, i32
  }
  func.func @transform_7(%arg0: i32) -> (i32, i32) {
    %c0_i32 = arith.constant 0 : i32
    %c0_i32_0 = arith.constant 0 : i32
    %c0_i32_1 = arith.constant 0 : i32
    return %c0_i32, %c0_i32_0 : i32, i32
  }
  func.func @transform_8(%arg0: i32) -> (i32, i32) {
    %c0_i32 = arith.constant 0 : i32
    %c0_i32_0 = arith.constant 0 : i32
    return %arg0, %c0_i32 : i32, i32
  }
}

</mosaic_0001>

<llo_original>
// kernel: tile.23
$region0: #{tile.23}
  #allocation0 [shape = 's32[1]{0}', space=sflag, size = 0x4, scoped, tag = 'scoped memory for tile.23']
  %s0 = inlined_call_operand.vmem [shape: f32[64], index: 0, kind: input, shape index: {}]
  %s1 = inlined_call_operand.vmem [shape: f32[4,64], index: 1, kind: output, shape index: {}]
  // Predicated region
  $region2: #{tile.23} parent=0 // pred_check
    _
  $region3: #{tile.23} parent=0 // pred_check_branch
    %3 = sbr.rel (0) target = $region5
  $region4: #{tile.23} parent=0 // pred_region
    _
  $region5: #{tile.23} parent=0 // pred_fallthru
    _
  %v4 = vld [vmem:[%s0] ss:$0 sm:$0xff]
  %5 = vst [vmem:[%s1] sm:$0xf] %v4

// kernel: tile.24
$region0: #{tile.24}
  %s0 = inlined_call_operand.vmem [shape: f32[4,64], index: 0, kind: input, shape index: {}]
  %s1 = inlined_call_operand.vmem [shape: f32[1,256], index: 1, kind: output, shape index: {}]
  $region1: #{tile.24} parent=0
    #allocation0 [shape = 'u8[8192]{0}', space=vmem, size = 0x2000, scoped, tag = 'scoped mem for output reshape']
    #allocation1 [shape = 'u8[4096]{0}', space=vmem, size = 0x1000, scoped, tag = 'scoped mem for input reshape']
    %s3 = sshllo.u32 0, 4
    %v4 = vld [vmem:[%s0] sm:%s3]
    %5 = vst [vmem:[#allocation1] sm:%s3] %v4
    %s6 = smov 3
    %v7 = vld [vmem:[#allocation1] ss:$2 sm:%s6]
    %vm8 = vcmask 523264
    %9 = vst.msk [vmem:[#allocation0] ss:$8 sm:$0x3] %vm8, %v7
    %s10 = scalar_lea.vmem [#allocation1], 1
    %s11 = smov 3
    %v12 = vld [vmem:[%s10] ss:$2 sm:%s11]
    %13 = vrot.lane.b32.xlu0 %v12, 64
    %v14 = vpop.permute.xlu0 %13
    %vm15 = vcmask 1048064
    %16 = vst.msk [vmem:[#allocation0] ss:$8 sm:$0x3] %vm15, %v14
    %s18 = sshllo.u32 0, 1
    %v20 = vld [vmem:[#allocation0] sm:%s18]
    %s21 = sshllo.u32 0, 1
    %22 = vst [vmem:[%s1] sm:%s21] %v20
    %s23 = scalar_lea.vmem [#allocation0], 8
    %v24 = vld [vmem:[%s23] sm:%s18]
    %s25 = sshllo.u32 0, 1
    %s26 = scalar_lea.vmem %s1, 1
    %27 = vst [vmem:[%s26] sm:%s25] %v24

// kernel: tile.28
$region0: #{tile.28}
  #allocation0 [shape = 's32[1]{0}', space=sflag, size = 0x4, scoped, tag = 'scoped memory for tile.28']
  %s0 = inlined_call_operand.vmem [shape: f32[32], index: 0, kind: input, shape index: {}]
  %s1 = inlined_call_operand.vmem [shape: f32[4,32], index: 1, kind: output, shape index: {}]
  // Predicated region
  $region2: #{tile.28} parent=0 // pred_check
    _
  $region3: #{tile.28} parent=0 // pred_check_branch
    %3 = sbr.rel (0) target = $region5
  $region4: #{tile.28} parent=0 // pred_region
    _
  $region5: #{tile.28} parent=0 // pred_fallthru
    _
  %v4 = vld [vmem:[%s0] ss:$0 sm:$0xff]
  %5 = vst [vmem:[%s1] sm:$0xf] %v4

// kernel: tile.29
$region0: #{tile.29}
  %s0 = inlined_call_operand.vmem [shape: f32[4,32], index: 0, kind: input, shape index: {}]
  %s1 = inlined_call_operand.vmem [shape: f32[1,128], index: 1, kind: output, shape index: {}]
  $region1: #{tile.29} parent=0
    #allocation0 [shape = 'u8[4096]{0}', space=vmem, size = 0x1000, scoped, tag = 'scoped mem for output reshape']
    #allocation1 [shape = 'u8[4096]{0}', space=vmem, size = 0x1000, scoped, tag = 'scoped mem for input reshape']
    %s3 = sshllo.u32 0, 4
    %v4 = vld [vmem:[%s0] sm:%s3]
    %5 = vst [vmem:[#allocation1] sm:%s3] %v4
    %v6 = vld [vmem:[#allocation1] sm:$0x1]
    %vm7 = vcmask 261120
    %8 = vst.msk [vmem:[#allocation0] sm:$0x1] %vm7, %v6
    %s9 = scalar_lea.vmem [#allocation1], 3
    %v10 = vld [vmem:[%s9] sm:$0x1]
    %11 = vrot.lane.b32.xlu0 %v10, 96
    %v12 = vpop.permute.xlu0 %11
    %vm13 = vcmask 1048320
    %14 = vst.msk [vmem:[#allocation0] sm:$0x1] %vm13, %v12
    %s15 = scalar_lea.vmem [#allocation1], 2
    %v16 = vld [vmem:[%s15] sm:$0x1]
    %17 = vrot.lane.b32.xlu0 %v16, 64
    %v18 = vpop.permute.xlu0 %17
    %vm19 = vcmask 785920
    %20 = vst.msk [vmem:[#allocation0] sm:$0x1] %vm19, %v18
    %s21 = scalar_lea.vmem [#allocation1], 1
    %v22 = vld [vmem:[%s21] sm:$0x1]
    %23 = vrot.lane.b32.xlu0 %v22, 32
    %v24 = vpop.permute.xlu0 %23
    %vm25 = vcmask 523520
    %26 = vst.msk [vmem:[#allocation0] sm:$0x1] %vm25, %v24
    %s28 = sshllo.u32 0, 1
    %v30 = vld [vmem:[#allocation0] sm:%s28]
    %s31 = sshllo.u32 0, 1
    %32 = vst [vmem:[%s1] sm:%s31] %v30

// kernel: feed_forward_position.1
$region0: #{feed_forward_position.1}
  #allocation0 [shape = 'u32[]', space=smem, size = 0x4, offset = 0x4, fixed_abs, tag = 'smem constant byte address 0x4 - core index']
  #allocation1 [shape = 'u32[144,128]{1,0:T(1,128)}', space=vmem, size = 0x12000, scoped, tag = 'internal scratch']
  %s0 = inlined_call_operand.vmem [shape: f32[8,128], index: 0, kind: input, shape index: {}]
  %s1 = inlined_call_operand.vmem [shape: bf16[128,256], index: 1, kind: input, shape index: {}]
  %s2 = inlined_call_operand.vmem [shape: f32[1,256], index: 2, kind: input, shape index: {}]
  %s3 = inlined_call_operand.vmem [shape: bf16[256,128], index: 3, kind: input, shape index: {}]
  %s4 = inlined_call_operand.vmem [shape: f32[1,128], index: 4, kind: input, shape index: {}]
  %s5 = inlined_call_operand.vmem [shape: f32[1,128], index: 5, kind: input, shape index: {}]
  %s6 = inlined_call_operand.vmem [shape: f32[1,128], index: 6, kind: input, shape index: {}]
  %s7 = inlined_call_operand.vmem [shape: bf16[128,128], index: 7, kind: input, shape index: {}]
  %s8 = inlined_call_operand.vmem [shape: f32[8,128], index: 8, kind: output, shape index: {}]
  %s9 = sld [smem:[#allocation0]]
  $region42: #{feed_forward_position.1} parent=0
    _
  %s11 = ssub.s32 1, %s9
  %s12 = scalar_select 0, %s11, %s9
  // Predicated region
  $region2: #{feed_forward_position.1} parent=0 // pred_check
    _
  $region3: #{feed_forward_position.1} parent=0 // pred_check_branch
    %14 = sbr.rel (0) target = $region5
  $region4: #{feed_forward_position.1} parent=0 // pred_region
    _
  $region5: #{feed_forward_position.1} parent=0 // pred_fallthru
    _
  // Predicated region
  $region6: #{feed_forward_position.1} parent=0 // pred_check
    _
  $region7: #{feed_forward_position.1} parent=0 // pred_check_branch
    %16 = sbr.rel (0) target = $region9
  $region8: #{feed_forward_position.1} parent=0 // pred_region
    _
  $region9: #{feed_forward_position.1} parent=0 // pred_fallthru
    _
  // Predicated region
  $region10: #{feed_forward_position.1} parent=0 // pred_check
    _
  $region11: #{feed_forward_position.1} parent=0 // pred_check_branch
    %18 = sbr.rel (0) target = $region13
  $region12: #{feed_forward_position.1} parent=0 // pred_region
    _
  $region13: #{feed_forward_position.1} parent=0 // pred_fallthru
    _
  // Predicated region
  $region14: #{feed_forward_position.1} parent=0 // pred_check
    _
  $region15: #{feed_forward_position.1} parent=0 // pred_check_branch
    %20 = sbr.rel (0) target = $region17
  $region16: #{feed_forward_position.1} parent=0 // pred_region
    _
  $region17: #{feed_forward_position.1} parent=0 // pred_fallthru
    _
  // Predicated region
  $region18: #{feed_forward_position.1} parent=0 // pred_check
    _
  $region19: #{feed_forward_position.1} parent=0 // pred_check_branch
    %22 = sbr.rel (0) target = $region21
  $region20: #{feed_forward_position.1} parent=0 // pred_region
    _
  $region21: #{feed_forward_position.1} parent=0 // pred_fallthru
    _
  // Predicated region
  $region22: #{feed_forward_position.1} parent=0 // pred_check
    _
  $region23: #{feed_forward_position.1} parent=0 // pred_check_branch
    %24 = sbr.rel (0) target = $region25
  $region24: #{feed_forward_position.1} parent=0 // pred_region
    _
  $region25: #{feed_forward_position.1} parent=0 // pred_fallthru
    _
  // Predicated region
  $region26: #{feed_forward_position.1} parent=0 // pred_check
    _
  $region27: #{feed_forward_position.1} parent=0 // pred_check_branch
    %26 = sbr.rel (0) target = $region29
  $region28: #{feed_forward_position.1} parent=0 // pred_region
    _
  $region29: #{feed_forward_position.1} parent=0 // pred_fallthru
    _
  // Predicated region
  $region30: #{feed_forward_position.1} parent=0 // pred_check
    _
  $region31: #{feed_forward_position.1} parent=0 // pred_check_branch
    %28 = sbr.rel (0) target = $region33
  $region32: #{feed_forward_position.1} parent=0 // pred_region
    _
  $region33: #{feed_forward_position.1} parent=0 // pred_fallthru
    _
  %v30 = vld [vmem:[%s0] sm:$0xff]
  %v31 = vpack.c.bf16 %v30, %v30
  %v32 = vld [vmem:[%s1] sm:$0xff]
  %v33 = vld [vmem:[%s1 + $0x8] sm:$0xff]
  %v34 = vld [vmem:[%s1 + $0x10] sm:$0xff]
  %v35 = vld [vmem:[%s1 + $0x18] sm:$0xff]
  %v36 = vld [vmem:[%s1 + $0x20] sm:$0xff]
  %v37 = vld [vmem:[%s1 + $0x28] sm:$0xff]
  %v38 = vld [vmem:[%s1 + $0x30] sm:$0xff]
  %v39 = vld [vmem:[%s1 + $0x38] sm:$0xff]
  %v40 = vld [vmem:[%s1 + $0x40] sm:$0xff]
  %v41 = vld [vmem:[%s1 + $0x48] sm:$0xff]
  %v42 = vld [vmem:[%s1 + $0x50] sm:$0xff]
  %v43 = vld [vmem:[%s1 + $0x58] sm:$0xff]
  %v44 = vld [vmem:[%s1 + $0x60] sm:$0xff]
  %v45 = vld [vmem:[%s1 + $0x68] sm:$0xff]
  %v46 = vld [vmem:[%s1 + $0x70] sm:$0xff]
  %v47 = vld [vmem:[%s1 + $0x78] sm:$0xff]
  %v48 = vld [vmem:[%s2] sm:$0x3]
  %v50 = vlaneseq
  %v51 = vshrl.u32 %v50, 7
  %v52 = vsub.s32 0, %v51
  %v53 = vrot.slane %v48, %v52
  %v54 = vlaneseq
  %v55 = vshrl.u32 %v54, 7
  %v56 = vsub.s32 1, %v55
  %v57 = vrot.slane %v48, %v56
  %v76 = vunpack.c.l.b16 %v32
  %v77 = vunpack.c.h.b16 %v32
  %v78 = vunpack.c.l.b16 %v33
  %v79 = vunpack.c.h.b16 %v33
  %v80 = vunpack.c.l.b16 %v34
  %v81 = vunpack.c.h.b16 %v34
  %v82 = vunpack.c.l.b16 %v35
  %v83 = vunpack.c.h.b16 %v35
  %v84 = vunpack.c.l.b16 %v36
  %v85 = vunpack.c.h.b16 %v36
  %v86 = vunpack.c.l.b16 %v37
  %v87 = vunpack.c.h.b16 %v37
  %v88 = vunpack.c.l.b16 %v38
  %v89 = vunpack.c.h.b16 %v38
  %v90 = vunpack.c.l.b16 %v39
  %v91 = vunpack.c.h.b16 %v39
  %v92 = vunpack.c.l.b16 %v40
  %v93 = vunpack.c.h.b16 %v40
  %v94 = vunpack.c.l.b16 %v41
  %v95 = vunpack.c.h.b16 %v41
  %v96 = vunpack.c.l.b16 %v42
  %v97 = vunpack.c.h.b16 %v42
  %v98 = vunpack.c.l.b16 %v43
  %v99 = vunpack.c.h.b16 %v43
  %v100 = vunpack.c.l.b16 %v44
  %v101 = vunpack.c.h.b16 %v44
  %v102 = vunpack.c.l.b16 %v45
  %v103 = vunpack.c.h.b16 %v45
  %v104 = vunpack.c.l.b16 %v46
  %v105 = vunpack.c.h.b16 %v46
  %v106 = vunpack.c.l.b16 %v47
  %v107 = vunpack.c.h.b16 %v47
  %v108 = vpack.c.b16 %v78, %v76
  %v109 = vpack.c.b16 %v79, %v77
  %v110 = vpack.c.b16 %v82, %v80
  %v111 = vpack.c.b16 %v83, %v81
  %v112 = vpack.c.b16 %v86, %v84
  %v113 = vpack.c.b16 %v87, %v85
  %v114 = vpack.c.b16 %v90, %v88
  %v115 = vpack.c.b16 %v91, %v89
  %v116 = vpack.c.b16 %v94, %v92
  %v117 = vpack.c.b16 %v95, %v93
  %v118 = vpack.c.b16 %v98, %v96
  %v119 = vpack.c.b16 %v99, %v97
  %v120 = vpack.c.b16 %v102, %v100
  %v121 = vpack.c.b16 %v103, %v101
  %v122 = vpack.c.b16 %v106, %v104
  %v123 = vpack.c.b16 %v107, %v105
  %140 = vmatprep.subr.bf16.mxu0 %v109
  %141 = vmatpush1.bf16.msra.mxu0 %v108
  %142 = vmatprep.subr.bf16.mxu0 %v111
  %143 = vmatpush1.bf16.msra.mxu0 %v110
  %144 = vmatprep.subr.bf16.mxu0 %v113
  %145 = vmatpush1.bf16.msra.mxu0 %v112
  %146 = vmatprep.subr.bf16.mxu0 %v115
  %147 = vmatpush1.bf16.msra.mxu0 %v114
  %148 = vmatprep.subr.bf16.mxu0 %v117
  %149 = vmatpush1.bf16.msra.mxu0 %v116
  %150 = vmatprep.subr.bf16.mxu0 %v119
  %151 = vmatpush1.bf16.msra.mxu0 %v118
  %152 = vmatprep.subr.bf16.mxu0 %v121
  %153 = vmatpush1.bf16.msra.mxu0 %v120
  %154 = vmatprep.subr.bf16.mxu0 %v123
  %155 = vmatpush1.bf16.msra.mxu0 %v122
  %156 = vmatprep.subr.bf16.mxu0 0
  %157 = vmatpush1.bf16.msra.mxu0 0
  %158 = vmatprep.subr.bf16.mxu0 0
  %159 = vmatpush1.bf16.msra.mxu0 0
  %160 = vmatprep.subr.bf16.mxu0 0
  %161 = vmatpush1.bf16.msra.mxu0 0
  %162 = vmatprep.subr.bf16.mxu0 0
  %163 = vmatpush1.bf16.msra.mxu0 0
  %164 = vmatprep.subr.bf16.mxu0 0
  %165 = vmatpush1.bf16.msra.mxu0 0
  %166 = vmatprep.subr.bf16.mxu0 0
  %167 = vmatpush1.bf16.msra.mxu0 0
  %168 = vmatprep.subr.bf16.mxu0 0
  %169 = vmatpush1.bf16.msra.mxu0 0
  %170 = vmatprep.subr.bf16.mxu0 0
  %171 = vmatpush1.bf16.msra.mxu0 0
  %172 = vmatprep.mubr.bf16.mxu0 0
  %173 = vmatmul.mubr.bf16.gmra.mrb[0].mxu0 %v31
  %v174 = vpop.f32.mrb[0].mxu0
  %v175 = vadd.f32 %v53, %v174
  %v176 = vpop.f32.mrb[0].mxu0
  %v177 = vadd.f32 %v57, %v176
  %v178 = vpop.f32.mrb[0].mxu0
  %v179 = vpop.f32.mrb[0].mxu0
  %180 = vdwg.mxu0
  %v181 = vpack.c.bf16 %v175, %v175
  %v182 = vpack.c.bf16 %v177, %v177
  %v183 = vld [vmem:[%s3] sm:$0xf]
  %v184 = vld [vmem:[%s3 + $0x4] sm:$0xf]
  %v185 = vld [vmem:[%s3 + $0x8] sm:$0xf]
  %v186 = vld [vmem:[%s3 + $0xc] sm:$0xf]
  %v187 = vld [vmem:[%s3 + $0x10] sm:$0xf]
  %v188 = vld [vmem:[%s3 + $0x14] sm:$0xf]
  %v189 = vld [vmem:[%s3 + $0x18] sm:$0xf]
  %v190 = vld [vmem:[%s3 + $0x1c] sm:$0xf]
  %v191 = vld [vmem:[%s3 + $0x20] sm:$0xf]
  %v192 = vld [vmem:[%s3 + $0x24] sm:$0xf]
  %v193 = vld [vmem:[%s3 + $0x28] sm:$0xf]
  %v194 = vld [vmem:[%s3 + $0x2c] sm:$0xf]
  %v195 = vld [vmem:[%s3 + $0x30] sm:$0xf]
  %v196 = vld [vmem:[%s3 + $0x34] sm:$0xf]
  %v197 = vld [vmem:[%s3 + $0x38] sm:$0xf]
  %v198 = vld [vmem:[%s3 + $0x3c] sm:$0xf]
  %v199 = vld [vmem:[%s3 + $0x40] sm:$0xf]
  %v200 = vld [vmem:[%s3 + $0x44] sm:$0xf]
  %v201 = vld [vmem:[%s3 + $0x48] sm:$0xf]
  %v202 = vld [vmem:[%s3 + $0x4c] sm:$0xf]
  %v203 = vld [vmem:[%s3 + $0x50] sm:$0xf]
  %v204 = vld [vmem:[%s3 + $0x54] sm:$0xf]
  %v205 = vld [vmem:[%s3 + $0x58] sm:$0xf]
  %v206 = vld [vmem:[%s3 + $0x5c] sm:$0xf]
  %v207 = vld [vmem:[%s3 + $0x60] sm:$0xf]
  %v208 = vld [vmem:[%s3 + $0x64] sm:$0xf]
  %v209 = vld [vmem:[%s3 + $0x68] sm:$0xf]
  %v210 = vld [vmem:[%s3 + $0x6c] sm:$0xf]
  %v211 = vld [vmem:[%s3 + $0x70] sm:$0xf]
  %v212 = vld [vmem:[%s3 + $0x74] sm:$0xf]
  %v213 = vld [vmem:[%s3 + $0x78] sm:$0xf]
  %v214 = vld [vmem:[%s3 + $0x7c] sm:$0xf]
  %v215 = vld [vmem:[%s4] sm:$0x1]
  %v217 = vlaneseq
  %v218 = vshrl.u32 %v217, 7
  %v219 = vsub.s32 0, %v218
  %v220 = vrot.slane %v215, %v219
  %v254 = vunpack.c.l.b16 %v183
  %v255 = vunpack.c.l.b16 %v184
  %v256 = vunpack.c.l.b16 %v185
  %v257 = vunpack.c.l.b16 %v186
  %v258 = vunpack.c.l.b16 %v187
  %v259 = vunpack.c.l.b16 %v188
  %v260 = vunpack.c.l.b16 %v189
  %v261 = vunpack.c.l.b16 %v190
  %v262 = vunpack.c.l.b16 %v191
  %v263 = vunpack.c.l.b16 %v192
  %v264 = vunpack.c.l.b16 %v193
  %v265 = vunpack.c.l.b16 %v194
  %v266 = vunpack.c.l.b16 %v195
  %v267 = vunpack.c.l.b16 %v196
  %v268 = vunpack.c.l.b16 %v197
  %v269 = vunpack.c.l.b16 %v198
  %v270 = vunpack.c.l.b16 %v199
  %v271 = vunpack.c.l.b16 %v200
  %v272 = vunpack.c.l.b16 %v201
  %v273 = vunpack.c.l.b16 %v202
  %v274 = vunpack.c.l.b16 %v203
  %v275 = vunpack.c.l.b16 %v204
  %v276 = vunpack.c.l.b16 %v205
  %v277 = vunpack.c.l.b16 %v206
  %v278 = vunpack.c.l.b16 %v207
  %v279 = vunpack.c.l.b16 %v208
  %v280 = vunpack.c.l.b16 %v209
  %v281 = vunpack.c.l.b16 %v210
  %v282 = vunpack.c.l.b16 %v211
  %v283 = vunpack.c.l.b16 %v212
  %v284 = vunpack.c.l.b16 %v213
  %v285 = vunpack.c.l.b16 %v214
  %v286 = vpack.c.b16 %v255, %v254
  %v287 = vpack.c.b16 %v257, %v256
  %v288 = vpack.c.b16 %v259, %v258
  %v289 = vpack.c.b16 %v261, %v260
  %v290 = vpack.c.b16 %v263, %v262
  %v291 = vpack.c.b16 %v265, %v264
  %v292 = vpack.c.b16 %v267, %v266
  %v293 = vpack.c.b16 %v269, %v268
  %v294 = vpack.c.b16 %v271, %v270
  %v295 = vpack.c.b16 %v273, %v272
  %v296 = vpack.c.b16 %v275, %v274
  %v297 = vpack.c.b16 %v277, %v276
  %v298 = vpack.c.b16 %v279, %v278
  %v299 = vpack.c.b16 %v281, %v280
  %v300 = vpack.c.b16 %v283, %v282
  %v301 = vpack.c.b16 %v285, %v284
  %318 = vmatprep.subr.bf16.mxu0 0
  %319 = vmatpush1.bf16.msra.mxu0 %v286
  %320 = vmatprep.subr.bf16.mxu0 0
  %321 = vmatpush1.bf16.msra.mxu0 %v287
  %322 = vmatprep.subr.bf16.mxu0 0
  %323 = vmatpush1.bf16.msra.mxu0 %v288
  %324 = vmatprep.subr.bf16.mxu0 0
  %325 = vmatpush1.bf16.msra.mxu0 %v289
  %326 = vmatprep.subr.bf16.mxu0 0
  %327 = vmatpush1.bf16.msra.mxu0 %v290
  %328 = vmatprep.subr.bf16.mxu0 0
  %329 = vmatpush1.bf16.msra.mxu0 %v291
  %330 = vmatprep.subr.bf16.mxu0 0
  %331 = vmatpush1.bf16.msra.mxu0 %v292
  %332 = vmatprep.subr.bf16.mxu0 0
  %333 = vmatpush1.bf16.msra.mxu0 %v293
  %334 = vmatprep.subr.bf16.mxu0 0
  %335 = vmatpush1.bf16.msra.mxu0 %v294
  %336 = vmatprep.subr.bf16.mxu0 0
  %337 = vmatpush1.bf16.msra.mxu0 %v295
  %338 = vmatprep.subr.bf16.mxu0 0
  %339 = vmatpush1.bf16.msra.mxu0 %v296
  %340 = vmatprep.subr.bf16.mxu0 0
  %341 = vmatpush1.bf16.msra.mxu0 %v297
  %342 = vmatprep.subr.bf16.mxu0 0
  %343 = vmatpush1.bf16.msra.mxu0 %v298
  %344 = vmatprep.subr.bf16.mxu0 0
  %345 = vmatpush1.bf16.msra.mxu0 %v299
  %346 = vmatprep.subr.bf16.mxu0 0
  %347 = vmatpush1.bf16.msra.mxu0 %v300
  %348 = vmatprep.subr.bf16.mxu0 0
  %349 = vmatpush1.bf16.msra.mxu0 %v301
  %350 = vmatprep.mubr.bf16.mxu0 %v182
  %351 = vmatmul.mubr.bf16.gmra.mrb[0].mxu0 %v181
  %v352 = vpop.f32.mrb[0].mxu0
  %v353 = vadd.f32 %v220, %v352
  %v354 = vpop.f32.mrb[0].mxu0
  %v355 = vpop.f32.mrb[0].mxu0
  %v356 = vpop.f32.mrb[0].mxu0
  %357 = vdwg.mxu0
  %v358 = vadd.f32 %v353, %v30
  %v359 = vld [vmem:[%s7] sm:$0xf]
  %v360 = vld [vmem:[%s7 + $0x4] sm:$0xf]
  %v361 = vld [vmem:[%s7 + $0x8] sm:$0xf]
  %v362 = vld [vmem:[%s7 + $0xc] sm:$0xf]
  %v363 = vld [vmem:[%s7 + $0x10] sm:$0xf]
  %v364 = vld [vmem:[%s7 + $0x14] sm:$0xf]
  %v365 = vld [vmem:[%s7 + $0x18] sm:$0xf]
  %v366 = vld [vmem:[%s7 + $0x1c] sm:$0xf]
  %v367 = vld [vmem:[%s7 + $0x20] sm:$0xf]
  %v368 = vld [vmem:[%s7 + $0x24] sm:$0xf]
  %v369 = vld [vmem:[%s7 + $0x28] sm:$0xf]
  %v370 = vld [vmem:[%s7 + $0x2c] sm:$0xf]
  %v371 = vld [vmem:[%s7 + $0x30] sm:$0xf]
  %v372 = vld [vmem:[%s7 + $0x34] sm:$0xf]
  %v373 = vld [vmem:[%s7 + $0x38] sm:$0xf]
  %v374 = vld [vmem:[%s7 + $0x3c] sm:$0xf]
  %v375 = vpack.c.bf16 %v358, %v358
  %v392 = vunpack.c.l.b16 %v359
  %v393 = vunpack.c.l.b16 %v360
  %v394 = vunpack.c.l.b16 %v361
  %v395 = vunpack.c.l.b16 %v362
  %v396 = vunpack.c.l.b16 %v363
  %v397 = vunpack.c.l.b16 %v364
  %v398 = vunpack.c.l.b16 %v365
  %v399 = vunpack.c.l.b16 %v366
  %v400 = vunpack.c.l.b16 %v367
  %v401 = vunpack.c.l.b16 %v368
  %v402 = vunpack.c.l.b16 %v369
  %v403 = vunpack.c.l.b16 %v370
  %v404 = vunpack.c.l.b16 %v371
  %v405 = vunpack.c.l.b16 %v372
  %v406 = vunpack.c.l.b16 %v373
  %v407 = vunpack.c.l.b16 %v374
  %v408 = vpack.c.b16 %v393, %v392
  %v409 = vpack.c.b16 %v395, %v394
  %v410 = vpack.c.b16 %v397, %v396
  %v411 = vpack.c.b16 %v399, %v398
  %v412 = vpack.c.b16 %v401, %v400
  %v413 = vpack.c.b16 %v403, %v402
  %v414 = vpack.c.b16 %v405, %v404
  %v415 = vpack.c.b16 %v407, %v406
  %424 = vmatprep.subr.bf16.mxu0 0
  %425 = vmatpush1.bf16.msra.mxu0 %v408
  %426 = vmatprep.subr.bf16.mxu0 0
  %427 = vmatpush1.bf16.msra.mxu0 %v409
  %428 = vmatprep.subr.bf16.mxu0 0
  %429 = vmatpush1.bf16.msra.mxu0 %v410
  %430 = vmatprep.subr.bf16.mxu0 0
  %431 = vmatpush1.bf16.msra.mxu0 %v411
  %432 = vmatprep.subr.bf16.mxu0 0
  %433 = vmatpush1.bf16.msra.mxu0 %v412
  %434 = vmatprep.subr.bf16.mxu0 0
  %435 = vmatpush1.bf16.msra.mxu0 %v413
  %436 = vmatprep.subr.bf16.mxu0 0
  %437 = vmatpush1.bf16.msra.mxu0 %v414
  %438 = vmatprep.subr.bf16.mxu0 0
  %439 = vmatpush1.bf16.msra.mxu0 %v415
  %440 = vmatprep.subr.bf16.mxu0 0
  %441 = vmatpush1.bf16.msra.mxu0 0
  %442 = vmatprep.subr.bf16.mxu0 0
  %443 = vmatpush1.bf16.msra.mxu0 0
  %444 = vmatprep.subr.bf16.mxu0 0
  %445 = vmatpush1.bf16.msra.mxu0 0
  %446 = vmatprep.subr.bf16.mxu0 0
  %447 = vmatpush1.bf16.msra.mxu0 0
  %448 = vmatprep.subr.bf16.mxu0 0
  %449 = vmatpush1.bf16.msra.mxu0 0
  %450 = vmatprep.subr.bf16.mxu0 0
  %451 = vmatpush1.bf16.msra.mxu0 0
  %452 = vmatprep.subr.bf16.mxu0 0
  %453 = vmatpush1.bf16.msra.mxu0 0
  %454 = vmatprep.subr.bf16.mxu0 0
  %455 = vmatpush1.bf16.msra.mxu0 0
  %456 = vmatprep.mubr.bf16.mxu0 0
  %457 = vmatmul.mubr.bf16.gmra.mrb[0].mxu0 %v375
  %v458 = vpop.f32.mrb[0].mxu0
  %v459 = vadd.f32 0.0, %v458
  %v460 = vpop.f32.mrb[0].mxu0
  %v461 = vpop.f32.mrb[0].mxu0
  %v462 = vpop.f32.mrb[0].mxu0
  %463 = vdwg.mxu0
  %v464 = vsub.f32 %v358, %v459
  %v465 = vmul.f32 %v464, %v464
  %v466 = vpack.c.bf16 %v465, %v465
  %467 = vmatprep.subr.bf16.mxu0 0
  %468 = vmatpush1.bf16.msra.mxu0 %v408
  %469 = vmatprep.subr.bf16.mxu0 0
  %470 = vmatpush1.bf16.msra.mxu0 %v409
  %471 = vmatprep.subr.bf16.mxu0 0
  %472 = vmatpush1.bf16.msra.mxu0 %v410
  %473 = vmatprep.subr.bf16.mxu0 0
  %474 = vmatpush1.bf16.msra.mxu0 %v411
  %475 = vmatprep.subr.bf16.mxu0 0
  %476 = vmatpush1.bf16.msra.mxu0 %v412
  %477 = vmatprep.subr.bf16.mxu0 0
  %478 = vmatpush1.bf16.msra.mxu0 %v413
  %479 = vmatprep.subr.bf16.mxu0 0
  %480 = vmatpush1.bf16.msra.mxu0 %v414
  %481 = vmatprep.subr.bf16.mxu0 0
  %482 = vmatpush1.bf16.msra.mxu0 %v415
  %483 = vmatprep.subr.bf16.mxu0 0
  %484 = vmatpush1.bf16.msra.mxu0 0
  %485 = vmatprep.subr.bf16.mxu0 0
  %486 = vmatpush1.bf16.msra.mxu0 0
  %487 = vmatprep.subr.bf16.mxu0 0
  %488 = vmatpush1.bf16.msra.mxu0 0
  %489 = vmatprep.subr.bf16.mxu0 0
  %490 = vmatpush1.bf16.msra.mxu0 0
  %491 = vmatprep.subr.bf16.mxu0 0
  %492 = vmatpush1.bf16.msra.mxu0 0
  %493 = vmatprep.subr.bf16.mxu0 0
  %494 = vmatpush1.bf16.msra.mxu0 0
  %495 = vmatprep.subr.bf16.mxu0 0
  %496 = vmatpush1.bf16.msra.mxu0 0
  %497 = vmatprep.subr.bf16.mxu0 0
  %498 = vmatpush1.bf16.msra.mxu0 0
  %499 = vmatprep.mubr.bf16.mxu0 0
  %500 = vmatmul.mubr.bf16.gmra.mrb[0].mxu0 %v466
  %v501 = vpop.f32.mrb[0].mxu0
  %v502 = vadd.f32 1e-05, %v501
  %v503 = vpop.f32.mrb[0].mxu0
  %v504 = vpop.f32.mrb[0].mxu0
  %v505 = vpop.f32.mrb[0].mxu0
  %506 = vdwg.mxu0
  %v507 = vrsqrt.pop %v502
  %v508 = vmul.f32 %v464, %v507
  %v509 = vld [vmem:[%s5] sm:$0x1]
  %v511 = vlaneseq
  %v512 = vshrl.u32 %v511, 7
  %v513 = vsub.s32 0, %v512
  %v514 = vrot.slane %v509, %v513
  %v516 = vmul.f32 %v508, %v514
  %v517 = vld [vmem:[%s6] sm:$0x1]
  %v519 = vlaneseq
  %v520 = vshrl.u32 %v519, 7
  %v521 = vsub.s32 0, %v520
  %v522 = vrot.slane %v517, %v521
  %v524 = vadd.f32 %v516, %v522
  %525 = vst [vmem:[%s8] sm:$0xff] %v524
  // Predicated region
  $region34: #{feed_forward_position.1} parent=0 // pred_check
    _
  $region35: #{feed_forward_position.1} parent=0 // pred_check_branch
    %527 = sbr.rel (0) target = $region37
  $region36: #{feed_forward_position.1} parent=0 // pred_region
    _
  $region37: #{feed_forward_position.1} parent=0 // pred_fallthru
    _
  // Predicated region
  $region38: #{feed_forward_position.1} parent=0 // pred_check
    _
  $region39: #{feed_forward_position.1} parent=0 // pred_check_branch
    %529 = sbr.rel (0) target = $region41
  $region40: #{feed_forward_position.1} parent=0 // pred_region
    _
  $region41: #{feed_forward_position.1} parent=0 // pred_fallthru
    _

</llo_original>
